<compile_context>
chip_gen: v7x
topology: tpu7x:2x2x1
jax: 0.10.0
libtpu: 0.0.40
codegen_flags: <defaults>
</compile_context>

<pallas_src>
import jax
import jax.numpy as jnp
from jax.experimental import pallas as pl
from jax.experimental.pallas import tpu as pltpu


def _step_vmem_bytes(tb: int, ng: int, d_in: int, d_out: int, itemsize: int) -> int:
    """Rough per-grid-step VMEM footprint (double-buffered blocks + f32 temps)."""
    x_b = tb * ng * d_in
    w_b = ng * d_in * d_out
    b_b = ng * d_out
    o_b = tb * ng * d_out
    return 2 * (x_b + w_b + b_b + o_b) * itemsize + (tb * ng * d_out) * 4


def _pick_batch_tile(B: int, max_tile: int = 512) -> int:
    """Largest batch tile <= max_tile that divides B and is a multiple of 8."""
    max_tile = max(8, (max_tile // 8) * 8)
    if B <= max_tile:
        return B                       # full extent is always a legal block dim
    for t in range(max_tile, 7, -8):
        if B % t == 0:
            return t
    return B                           # fallback: single full-B tile


def _pick_layer_group(n: int, d_in: int, d_out: int, tb: int,
                      itemsize: int, budget: int) -> int:
    """Pick NG (layers per grid step).

    NG == n is always layout-legal (full-extent last block dims).  NG < n is
    only legal when NG*d_in and NG*d_out are multiples of 128 (lane tiling).
    """
    if _step_vmem_bytes(tb, n, d_in, d_out, itemsize) <= budget:
        return n
    for ng in sorted((d for d in range(1, n) if n % d == 0), reverse=True):
        if (ng * d_in) % 128 == 0 and (ng * d_out) % 128 == 0 and \
                _step_vmem_bytes(tb, ng, d_in, d_out, itemsize) <= budget:
            return ng
    # TODO(synk): if no 128-aligned divisor fits, we fall back to NG == n and
    # rely on the raised vmem_limit_bytes (may single-buffer on v7x).
    return n


def _make_nlinear_kernel(ng: int, d_in: int):
    def kernel(x_ref, w_ref, b_ref, o_ref):
        # x_ref: (TB, NG*d_in)  w_ref: (NG, d_in, d_out)
        # b_ref: (1, NG*d_out)  o_ref: (TB, NG*d_out)
        parts = []
        for g in range(ng):  # static unroll over the layer group
            xg = x_ref[:, g * d_in:(g + 1) * d_in]              # (TB, d_in)
            parts.append(jnp.dot(xg, w_ref[g],                  # MXU, f32 accum
                                 preferred_element_type=jnp.float32))
        y = parts[0] if ng == 1 else jnp.concatenate(parts, axis=-1)
        y = y + b_ref[...].astype(jnp.float32)
        o_ref[...] = y.astype(o_ref.dtype)                      # one lane-dense store
    return kernel


def nlinear_memory_efficient(x, weight, bias, *,
                             max_batch_tile: int = 512,
                             vmem_budget_bytes: int = 32 * 1024 * 1024):
    """x: (B, n, d_in); weight: (n, d_in, d_out); bias: (n, d_out) -> (B, n, d_out)."""
    assert x.ndim == 3
    B, n, d_in = x.shape
    n_w, d_in_w, d_out = weight.shape
    assert (n_w, d_in_w) == (n, d_in) and bias.shape == (n, d_out)

    itemsize = jnp.dtype(x.dtype).itemsize
    tb = _pick_batch_tile(B, max_batch_tile)
    ng = _pick_layer_group(n, d_in, d_out, tb, itemsize, vmem_budget_bytes)
    assert B % tb == 0 and n % ng == 0

    # Free row-major reshapes (no HBM transpose passes).
    x_flat = x.reshape(B, n * d_in)
    b_flat = bias.reshape(1, n * d_out)

    grid = (n // ng, B // tb)   # layer-group outer, batch-tile inner (weights resident)

    step_bytes = _step_vmem_bytes(tb, ng, d_in, d_out, itemsize)
    vmem_limit = int(min(64 * 1024 * 1024, max(16 * 1024 * 1024, 2 * step_bytes)))

    cost = pl.CostEstimate(
        flops=2 * B * n * d_in * d_out,
        transcendentals=0,
        bytes_accessed=(x.size + weight.size + bias.size + B * n * d_out) * itemsize,
    )

    out_flat = pl.pallas_call(
        _make_nlinear_kernel(ng, d_in),
        out_shape=jax.ShapeDtypeStruct((B, n * d_out), x.dtype),
        grid_spec=pltpu.PrefetchScalarGridSpec(
            num_scalar_prefetch=0,
            grid=grid,
            in_specs=[
                # x tile: (TB, NG*d_in), walks batch on inner axis j.
                pl.BlockSpec((tb, ng * d_in), lambda g, j: (j, g)),
                # weight group: constant over j -> fetched once per group.
                pl.BlockSpec((ng, d_in, d_out), lambda g, j: (g, 0, 0)),
                # bias group: constant over j -> fetched once per group.
                pl.BlockSpec((1, ng * d_out), lambda g, j: (0, g)),
            ],
            out_specs=pl.BlockSpec((tb, ng * d_out), lambda g, j: (j, g)),
        ),
        compiler_params=pltpu.CompilerParams(
            dimension_semantics=("parallel", "parallel"),
            vmem_limit_bytes=vmem_limit,
        ),
        cost_estimate=cost,
    )(x_flat, weight, b_flat)

    return out_flat.reshape(B, n, d_out)


def init_params(key, n, d_in, d_out, dtype=jnp.float32):
    # Mimic nn.Linear default init: U(-1/sqrt(d_in), 1/sqrt(d_in)).
    kw, kb = jax.random.split(key)
    bound = 1.0 / (d_in ** 0.5)
    weight = jax.random.uniform(kw, (n, d_in, d_out), dtype, -bound, bound)
    bias = jax.random.uniform(kb, (n, d_out), dtype, -bound, bound)
    return weight, bias


if __name__ == "__main__":
    key = jax.random.PRNGKey(0)

    # --- Case 1: toy shapes from the module spec (single grid step, NG = n). ---
    B, n, d_in, d_out = 8, 4, 32, 16
    k1, k2, key = jax.random.split(key, 3)
    x = jax.random.normal(k1, (B, n, d_in), jnp.float32)
    weight, bias = init_params(k2, n, d_in, d_out)
    out = jax.block_until_ready(nlinear_memory_efficient(x, weight, bias))
    ref = jnp.einsum("bni,nio->bno", x, weight) + bias[None, :, :]
    assert out.shape == (B, n, d_out)
    assert jnp.allclose(out, ref, atol=1e-5, rtol=1e-5), "mismatch vs reference (case 1)"

    # --- Case 2: exercise the tiled path (NG < n, multiple batch tiles). ---
    B2, n2, d_in2, d_out2 = 32, 8, 32, 128
    k3, k4, key = jax.random.split(key, 3)
    x2 = jax.random.normal(k3, (B2, n2, d_in2), jnp.float32)
    w2, b2 = init_params(k4, n2, d_in2, d_out2)
    out2 = jax.block_until_ready(
        nlinear_memory_efficient(x2, w2, b2,
                                 max_batch_tile=16,
                                 vmem_budget_bytes=300_000))  # forces NG=4 -> grid (2, 2)
    ref2 = jnp.einsum("bni,nio->bno", x2, w2) + b2[None, :, :]
    assert out2.shape == (B2, n2, d_out2)
    assert jnp.allclose(out2, ref2, atol=1e-4, rtol=1e-4), "mismatch vs reference (case 2)"

    print("KERNEL_OK")
</pallas_src>

<mosaic_0001>
module attributes {stable_mosaic.version = 11 : i64} {
  func.func @kernel(%arg0: i32, %arg1: i32, %arg2: memref<8x128xf32, #tpu.memory_space<vmem>>, %arg3: memref<4x32x16xf32, #tpu.memory_space<vmem>>, %arg4: memref<1x64xf32, #tpu.memory_space<vmem>>, %arg5: memref<8x64xf32, #tpu.memory_space<vmem>>) attributes {dimension_semantics = [#tpu.dimension_semantics<parallel>, #tpu.dimension_semantics<parallel>], iteration_bounds = array<i64: 1, 1>, scalar_prefetch = 0 : i64, scratch_operands = 0 : i64, tpu.core_type = #tpu.core_type<tc>, window_params = [{transform_indices = @transform_0, window_bounds = array<i64: 8, 128>}, {transform_indices = @transform_1, window_bounds = array<i64: 4, 32, 16>}, {transform_indices = @transform_2, window_bounds = array<i64: 1, 64>}, {transform_indices = @transform_3, window_bounds = array<i64: 8, 64>}]} {
    %c0 = arith.constant 0 : index
    %c0_0 = arith.constant 0 : index
    %0 = vector.load %arg2[%c0, %c0_0] : memref<8x128xf32, #tpu.memory_space<vmem>>, vector<8x32xf32>
    %c0_1 = arith.constant 0 : index
    %c0_2 = arith.constant 0 : index
    %c0_3 = arith.constant 0 : index
    %1 = vector.load %arg3[%c0_1, %c0_2, %c0_3] : memref<4x32x16xf32, #tpu.memory_space<vmem>>, vector<1x32x16xf32>
    %2 = vector.shape_cast %1 : vector<1x32x16xf32> to vector<32x16xf32>
    %cst = arith.constant dense<0.000000e+00> : vector<8x16xf32>
    %3 = tpu.matmul %0, %2, %cst {dimension_numbers = #tpu.dot_dimension_numbers<[1], [0], [0], [1], [0, 0, 1, 1], [], []>} : vector<8x32xf32>, vector<32x16xf32>, vector<8x16xf32> -> vector<8x16xf32>
    %c0_4 = arith.constant 0 : index
    %c32 = arith.constant 32 : index
    %4 = vector.load %arg2[%c0_4, %c32] : memref<8x128xf32, #tpu.memory_space<vmem>>, vector<8x32xf32>
    %c1 = arith.constant 1 : index
    %c0_5 = arith.constant 0 : index
    %c0_6 = arith.constant 0 : index
    %5 = vector.load %arg3[%c1, %c0_5, %c0_6] : memref<4x32x16xf32, #tpu.memory_space<vmem>>, vector<1x32x16xf32>
    %6 = vector.shape_cast %5 : vector<1x32x16xf32> to vector<32x16xf32>
    %cst_7 = arith.constant dense<0.000000e+00> : vector<8x16xf32>
    %7 = tpu.matmul %4, %6, %cst_7 {dimension_numbers = #tpu.dot_dimension_numbers<[1], [0], [0], [1], [0, 0, 1, 1], [], []>} : vector<8x32xf32>, vector<32x16xf32>, vector<8x16xf32> -> vector<8x16xf32>
    %c0_8 = arith.constant 0 : index
    %c64 = arith.constant 64 : index
    %8 = vector.load %arg2[%c0_8, %c64] : memref<8x128xf32, #tpu.memory_space<vmem>>, vector<8x32xf32>
    %c2 = arith.constant 2 : index
    %c0_9 = arith.constant 0 : index
    %c0_10 = arith.constant 0 : index
    %9 = vector.load %arg3[%c2, %c0_9, %c0_10] : memref<4x32x16xf32, #tpu.memory_space<vmem>>, vector<1x32x16xf32>
    %10 = vector.shape_cast %9 : vector<1x32x16xf32> to vector<32x16xf32>
    %cst_11 = arith.constant dense<0.000000e+00> : vector<8x16xf32>
    %11 = tpu.matmul %8, %10, %cst_11 {dimension_numbers = #tpu.dot_dimension_numbers<[1], [0], [0], [1], [0, 0, 1, 1], [], []>} : vector<8x32xf32>, vector<32x16xf32>, vector<8x16xf32> -> vector<8x16xf32>
    %c0_12 = arith.constant 0 : index
    %c96 = arith.constant 96 : index
    %12 = vector.load %arg2[%c0_12, %c96] : memref<8x128xf32, #tpu.memory_space<vmem>>, vector<8x32xf32>
    %c3 = arith.constant 3 : index
    %c0_13 = arith.constant 0 : index
    %c0_14 = arith.constant 0 : index
    %13 = vector.load %arg3[%c3, %c0_13, %c0_14] : memref<4x32x16xf32, #tpu.memory_space<vmem>>, vector<1x32x16xf32>
    %14 = vector.shape_cast %13 : vector<1x32x16xf32> to vector<32x16xf32>
    %cst_15 = arith.constant dense<0.000000e+00> : vector<8x16xf32>
    %15 = tpu.matmul %12, %14, %cst_15 {dimension_numbers = #tpu.dot_dimension_numbers<[1], [0], [0], [1], [0, 0, 1, 1], [], []>} : vector<8x32xf32>, vector<32x16xf32>, vector<8x16xf32> -> vector<8x16xf32>
    %16 = tpu.concatenate %3, %7, %11, %15 in 1 : vector<8x16xf32>, vector<8x16xf32>, vector<8x16xf32>, vector<8x16xf32> -> vector<8x64xf32>
    %c0_16 = arith.constant 0 : index
    %c0_17 = arith.constant 0 : index
    %17 = vector.load %arg4[%c0_16, %c0_17] : memref<1x64xf32, #tpu.memory_space<vmem>>, vector<1x64xf32>
    %18 = vector.broadcast %17 : vector<1x64xf32> to vector<8x64xf32>
    %19 = arith.addf %16, %18 : vector<8x64xf32>
    %c0_18 = arith.constant 0 : index
    %c0_19 = arith.constant 0 : index
    %20 = vector.load %arg5[%c0_18, %c0_19] : memref<8x64xf32, #tpu.memory_space<vmem>>, vector<8x64xf32>
    tpu.vector_store %arg5[%c0_18, %c0_19], %19 {strides = array<i32>} : memref<8x64xf32, #tpu.memory_space<vmem>>, vector<8x64xf32>,
    return
  }
  func.func @transform_0(%arg0: i32, %arg1: i32) -> (i32, i32) {
    %c0_i32 = arith.constant 0 : i32
    return %arg1, %arg0 : i32, i32
  }
  func.func @transform_1(%arg0: i32, %arg1: i32) -> (i32, i32, i32) {
    %c0_i32 = arith.constant 0 : i32
    %c0_i32_0 = arith.constant 0 : i32
    %c0_i32_1 = arith.constant 0 : i32
    return %arg0, %c0_i32, %c0_i32_0 : i32, i32, i32
  }
  func.func @transform_2(%arg0: i32, %arg1: i32) -> (i32, i32) {
    %c0_i32 = arith.constant 0 : i32
    %c0_i32_0 = arith.constant 0 : i32
    return %c0_i32, %arg0 : i32, i32
  }
  func.func @transform_3(%arg0: i32, %arg1: i32) -> (i32, i32) {
    %c0_i32 = arith.constant 0 : i32
    return %arg1, %arg0 : i32, i32
  }
}

</mosaic_0001>

<llo_original>
// kernel: tpu_custom_call.1
$region0: #{tpu_custom_call.1}
  #allocation0 [shape = 'u32[]', space=smem, size = 0x4, offset = 0x4, fixed_abs, tag = 'smem constant byte address 0x4 - core index']
  #allocation1 [shape = 'u32[144,128]{1,0:T(1,128)}', space=vmem, size = 0x12000, scoped, tag = 'internal scratch']
  %s0 = inlined_call_operand.vmem [shape: f32[8,128], index: 0, kind: input, shape index: {}]
  %s1 = inlined_call_operand.vmem [shape: f32[4,32,16], index: 1, kind: input, shape index: {}]
  %s2 = inlined_call_operand.vmem [shape: f32[1,64], index: 2, kind: input, shape index: {}]
  %s3 = inlined_call_operand.hbm [shape: f32[8,64], index: 3, kind: output, shape index: {}]
  %s4 = sld [smem:[#allocation0]]
  $region22: #{tpu_custom_call.1} parent=0
    _
  %s6 = ssub.s32 1, %s4
  %s7 = scalar_select 0, %s6, %s4
  $region1: #{tpu_custom_call.1} parent=0
    #allocation2 [shape = 'u8[4096]{0}', space=vmem, size = 0x1000, scoped, tag = 'output window, operand 0, single buffered']
    #allocation3 [shape = 's32[1]{0}', space=sflag, size = 0x4, scoped, tag = 'scoped memory for tpu_custom_call.1']
    %8 = vsyncpa [#allocation3], 0
    // Predicated region
    $region2: #{tpu_custom_call.1} parent=1 // pred_check
      _
    $region3: #{tpu_custom_call.1} parent=1 // pred_check_branch
      %10 = sbr.rel (0) target = $region5
    $region4: #{tpu_custom_call.1} parent=1 // pred_region
      _
    $region5: #{tpu_custom_call.1} parent=1 // pred_fallthru
      _
    // Predicated region
    $region6: #{tpu_custom_call.1} parent=1 // pred_check
      _
    $region7: #{tpu_custom_call.1} parent=1 // pred_check_branch
      %12 = sbr.rel (0) target = $region9
    $region8: #{tpu_custom_call.1} parent=1 // pred_region
      _
    $region9: #{tpu_custom_call.1} parent=1 // pred_fallthru
      _
    // Predicated region
    $region10: #{tpu_custom_call.1} parent=1 // pred_check
      _
    $region11: #{tpu_custom_call.1} parent=1 // pred_check_branch
      %14 = sbr.rel (0) target = $region13
    $region12: #{tpu_custom_call.1} parent=1 // pred_region
      _
    $region13: #{tpu_custom_call.1} parent=1 // pred_fallthru
      _
    %v15 = vld [vmem:[%s0] sm:$0xff]
    %v16 = vld [vmem:[%s1] sm:$0xff]
    %v17 = vld [vmem:[%s1 + $0x8] sm:$0xff]
    %v18 = vld [vmem:[%s1 + $0x10] sm:$0xff]
    %v19 = vld [vmem:[%s1 + $0x18] sm:$0xff]
    %vm20 = vcmask 261120
    %v22 = vsel %vm20, %v15, 0
    %24 = vmatprep.subr.mxu0 0.0
    %25 = vmatpush1.msra.mxu0 %v16
    %26 = vmatprep.subr.mxu0 0.0
    %27 = vmatpush1.msra.mxu0 %v17
    %28 = vmatprep.subr.mxu0 0.0
    %29 = vmatpush1.msra.mxu0 %v18
    %30 = vmatprep.subr.mxu0 0.0
    %31 = vmatpush1.msra.mxu0 %v19
    %32 = vmatprep.subr.mxu0 0.0
    %33 = vmatpush1.msra.mxu0 0.0
    %34 = vmatprep.subr.mxu0 0.0
    %35 = vmatpush1.msra.mxu0 0.0
    %36 = vmatprep.subr.mxu0 0.0
    %37 = vmatpush1.msra.mxu0 0.0
    %38 = vmatprep.subr.mxu0 0.0
    %39 = vmatpush1.msra.mxu0 0.0
    %40 = vmatprep.subr.mxu0 0.0
    %41 = vmatpush1.msra.mxu0 0.0
    %42 = vmatprep.subr.mxu0 0.0
    %43 = vmatpush1.msra.mxu0 0.0
    %44 = vmatprep.subr.mxu0 0.0
    %45 = vmatpush1.msra.mxu0 0.0
    %46 = vmatprep.subr.mxu0 0.0
    %47 = vmatpush1.msra.mxu0 0.0
    %48 = vmatprep.subr.mxu0 0.0
    %49 = vmatpush1.msra.mxu0 0.0
    %50 = vmatprep.subr.mxu0 0.0
    %51 = vmatpush1.msra.mxu0 0.0
    %52 = vmatprep.subr.mxu0 0.0
    %53 = vmatpush1.msra.mxu0 0.0
    %54 = vmatprep.subr.mxu0 0.0
    %55 = vmatpush1.msra.mxu0 0.0
    %56 = vmatprep.subr.mxu0 0.0
    %57 = vmatpush1.msra.mxu0 0.0
    %58 = vmatprep.subr.mxu0 0.0
    %59 = vmatpush1.msra.mxu0 0.0
    %60 = vmatprep.subr.mxu0 0.0
    %61 = vmatpush1.msra.mxu0 0.0
    %62 = vmatprep.subr.mxu0 0.0
    %63 = vmatpush1.msra.mxu0 0.0
    %64 = vmatprep.subr.mxu0 0.0
    %65 = vmatpush1.msra.mxu0 0.0
    %66 = vmatprep.subr.mxu0 0.0
    %67 = vmatpush1.msra.mxu0 0.0
    %68 = vmatprep.subr.mxu0 0.0
    %69 = vmatpush1.msra.mxu0 0.0
    %70 = vmatprep.subr.mxu0 0.0
    %71 = vmatpush1.msra.mxu0 0.0
    %72 = vmatprep.subr.mxu0 0.0
    %73 = vmatpush1.msra.mxu0 0.0
    %74 = vmatprep.subr.mxu0 0.0
    %75 = vmatpush1.msra.mxu0 0.0
    %76 = vmatprep.subr.mxu0 0.0
    %77 = vmatpush1.msra.mxu0 0.0
    %78 = vmatprep.subr.mxu0 0.0
    %79 = vmatpush1.msra.mxu0 0.0
    %80 = vmatprep.subr.mxu0 0.0
    %81 = vmatpush1.msra.mxu0 0.0
    %82 = vmatprep.subr.mxu0 0.0
    %83 = vmatpush1.msra.mxu0 0.0
    %84 = vmatprep.subr.mxu0 0.0
    %85 = vmatpush1.msra.mxu0 0.0
    %86 = vmatprep.subr.mxu0 0.0
    %87 = vmatpush1.msra.mxu0 0.0
    %88 = vmatprep.mubr.f32.mxu0 0.0
    %89 = vmatmul.mubr.f32.gmra.mrb[0].mxu0 %v22
    %v90 = vpop.f32.mrb[0].mxu0
    %v91 = vadd.f32 0.0, %v90
    %v92 = vpop.f32.mrb[0].mxu0
    %93 = vdwg.mxu0
    %s94 = scalar_lea.vmem %s1, 32
    %v95 = vld [vmem:[%s94] sm:$0xff]
    %v96 = vld [vmem:[%s94 + $0x8] sm:$0xff]
    %v97 = vld [vmem:[%s94 + $0x10] sm:$0xff]
    %v98 = vld [vmem:[%s94 + $0x18] sm:$0xff]
    %99 = vrot.lane.b32.xlu0 %v15, 96
    %v100 = vpop.permute.xlu0 %99
    %v101 = vsel %vm20, %v100, 0
    %103 = vmatprep.subr.mxu0 0.0
    %104 = vmatpush1.msra.mxu0 %v95
    %105 = vmatprep.subr.mxu0 0.0
    %106 = vmatpush1.msra.mxu0 %v96
    %107 = vmatprep.subr.mxu0 0.0
    %108 = vmatpush1.msra.mxu0 %v97
    %109 = vmatprep.subr.mxu0 0.0
    %110 = vmatpush1.msra.mxu0 %v98
    %111 = vmatprep.subr.mxu0 0.0
    %112 = vmatpush1.msra.mxu0 0.0
    %113 = vmatprep.subr.mxu0 0.0
    %114 = vmatpush1.msra.mxu0 0.0
    %115 = vmatprep.subr.mxu0 0.0
    %116 = vmatpush1.msra.mxu0 0.0
    %117 = vmatprep.subr.mxu0 0.0
    %118 = vmatpush1.msra.mxu0 0.0
    %119 = vmatprep.subr.mxu0 0.0
    %120 = vmatpush1.msra.mxu0 0.0
    %121 = vmatprep.subr.mxu0 0.0
    %122 = vmatpush1.msra.mxu0 0.0
    %123 = vmatprep.subr.mxu0 0.0
    %124 = vmatpush1.msra.mxu0 0.0
    %125 = vmatprep.subr.mxu0 0.0
    %126 = vmatpush1.msra.mxu0 0.0
    %127 = vmatprep.subr.mxu0 0.0
    %128 = vmatpush1.msra.mxu0 0.0
    %129 = vmatprep.subr.mxu0 0.0
    %130 = vmatpush1.msra.mxu0 0.0
    %131 = vmatprep.subr.mxu0 0.0
    %132 = vmatpush1.msra.mxu0 0.0
    %133 = vmatprep.subr.mxu0 0.0
    %134 = vmatpush1.msra.mxu0 0.0
    %135 = vmatprep.subr.mxu0 0.0
    %136 = vmatpush1.msra.mxu0 0.0
    %137 = vmatprep.subr.mxu0 0.0
    %138 = vmatpush1.msra.mxu0 0.0
    %139 = vmatprep.subr.mxu0 0.0
    %140 = vmatpush1.msra.mxu0 0.0
    %141 = vmatprep.subr.mxu0 0.0
    %142 = vmatpush1.msra.mxu0 0.0
    %143 = vmatprep.subr.mxu0 0.0
    %144 = vmatpush1.msra.mxu0 0.0
    %145 = vmatprep.subr.mxu0 0.0
    %146 = vmatpush1.msra.mxu0 0.0
    %147 = vmatprep.subr.mxu0 0.0
    %148 = vmatpush1.msra.mxu0 0.0
    %149 = vmatprep.subr.mxu0 0.0
    %150 = vmatpush1.msra.mxu0 0.0
    %151 = vmatprep.subr.mxu0 0.0
    %152 = vmatpush1.msra.mxu0 0.0
    %153 = vmatprep.subr.mxu0 0.0
    %154 = vmatpush1.msra.mxu0 0.0
    %155 = vmatprep.subr.mxu0 0.0
    %156 = vmatpush1.msra.mxu0 0.0
    %157 = vmatprep.subr.mxu0 0.0
    %158 = vmatpush1.msra.mxu0 0.0
    %159 = vmatprep.subr.mxu0 0.0
    %160 = vmatpush1.msra.mxu0 0.0
    %161 = vmatprep.subr.mxu0 0.0
    %162 = vmatpush1.msra.mxu0 0.0
    %163 = vmatprep.subr.mxu0 0.0
    %164 = vmatpush1.msra.mxu0 0.0
    %165 = vmatprep.subr.mxu0 0.0
    %166 = vmatpush1.msra.mxu0 0.0
    %167 = vmatprep.mubr.f32.mxu0 0.0
    %168 = vmatmul.mubr.f32.gmra.mrb[0].mxu0 %v101
    %v169 = vpop.f32.mrb[0].mxu0
    %v170 = vadd.f32 0.0, %v169
    %v171 = vpop.f32.mrb[0].mxu0
    %172 = vdwg.mxu0
    %s173 = scalar_lea.vmem %s1, 64
    %v174 = vld [vmem:[%s173] sm:$0xff]
    %v175 = vld [vmem:[%s173 + $0x8] sm:$0xff]
    %v176 = vld [vmem:[%s173 + $0x10] sm:$0xff]
    %v177 = vld [vmem:[%s173 + $0x18] sm:$0xff]
    %178 = vrot.lane.b32.xlu0 %v15, 64
    %v179 = vpop.permute.xlu0 %178
    %v180 = vsel %vm20, %v179, 0
    %182 = vmatprep.subr.mxu0 0.0
    %183 = vmatpush1.msra.mxu0 %v174
    %184 = vmatprep.subr.mxu0 0.0
    %185 = vmatpush1.msra.mxu0 %v175
    %186 = vmatprep.subr.mxu0 0.0
    %187 = vmatpush1.msra.mxu0 %v176
    %188 = vmatprep.subr.mxu0 0.0
    %189 = vmatpush1.msra.mxu0 %v177
    %190 = vmatprep.subr.mxu0 0.0
    %191 = vmatpush1.msra.mxu0 0.0
    %192 = vmatprep.subr.mxu0 0.0
    %193 = vmatpush1.msra.mxu0 0.0
    %194 = vmatprep.subr.mxu0 0.0
    %195 = vmatpush1.msra.mxu0 0.0
    %196 = vmatprep.subr.mxu0 0.0
    %197 = vmatpush1.msra.mxu0 0.0
    %198 = vmatprep.subr.mxu0 0.0
    %199 = vmatpush1.msra.mxu0 0.0
    %200 = vmatprep.subr.mxu0 0.0
    %201 = vmatpush1.msra.mxu0 0.0
    %202 = vmatprep.subr.mxu0 0.0
    %203 = vmatpush1.msra.mxu0 0.0
    %204 = vmatprep.subr.mxu0 0.0
    %205 = vmatpush1.msra.mxu0 0.0
    %206 = vmatprep.subr.mxu0 0.0
    %207 = vmatpush1.msra.mxu0 0.0
    %208 = vmatprep.subr.mxu0 0.0
    %209 = vmatpush1.msra.mxu0 0.0
    %210 = vmatprep.subr.mxu0 0.0
    %211 = vmatpush1.msra.mxu0 0.0
    %212 = vmatprep.subr.mxu0 0.0
    %213 = vmatpush1.msra.mxu0 0.0
    %214 = vmatprep.subr.mxu0 0.0
    %215 = vmatpush1.msra.mxu0 0.0
    %216 = vmatprep.subr.mxu0 0.0
    %217 = vmatpush1.msra.mxu0 0.0
    %218 = vmatprep.subr.mxu0 0.0
    %219 = vmatpush1.msra.mxu0 0.0
    %220 = vmatprep.subr.mxu0 0.0
    %221 = vmatpush1.msra.mxu0 0.0
    %222 = vmatprep.subr.mxu0 0.0
    %223 = vmatpush1.msra.mxu0 0.0
    %224 = vmatprep.subr.mxu0 0.0
    %225 = vmatpush1.msra.mxu0 0.0
    %226 = vmatprep.subr.mxu0 0.0
    %227 = vmatpush1.msra.mxu0 0.0
    %228 = vmatprep.subr.mxu0 0.0
    %229 = vmatpush1.msra.mxu0 0.0
    %230 = vmatprep.subr.mxu0 0.0
    %231 = vmatpush1.msra.mxu0 0.0
    %232 = vmatprep.subr.mxu0 0.0
    %233 = vmatpush1.msra.mxu0 0.0
    %234 = vmatprep.subr.mxu0 0.0
    %235 = vmatpush1.msra.mxu0 0.0
    %236 = vmatprep.subr.mxu0 0.0
    %237 = vmatpush1.msra.mxu0 0.0
    %238 = vmatprep.subr.mxu0 0.0
    %239 = vmatpush1.msra.mxu0 0.0
    %240 = vmatprep.subr.mxu0 0.0
    %241 = vmatpush1.msra.mxu0 0.0
    %242 = vmatprep.subr.mxu0 0.0
    %243 = vmatpush1.msra.mxu0 0.0
    %244 = vmatprep.subr.mxu0 0.0
    %245 = vmatpush1.msra.mxu0 0.0
    %246 = vmatprep.mubr.f32.mxu0 0.0
    %247 = vmatmul.mubr.f32.gmra.mrb[0].mxu0 %v180
    %v248 = vpop.f32.mrb[0].mxu0
    %v249 = vadd.f32 0.0, %v248
    %v250 = vpop.f32.mrb[0].mxu0
    %251 = vdwg.mxu0
    %s252 = scalar_lea.vmem %s1, 96
    %v253 = vld [vmem:[%s252] sm:$0xff]
    %v254 = vld [vmem:[%s252 + $0x8] sm:$0xff]
    %v255 = vld [vmem:[%s252 + $0x10] sm:$0xff]
    %v256 = vld [vmem:[%s252 + $0x18] sm:$0xff]
    %257 = vrot.lane.b32.xlu0 %v15, 32
    %v258 = vpop.permute.xlu0 %257
    %v259 = vsel %vm20, %v258, 0
    %261 = vmatprep.subr.mxu0 0.0
    %262 = vmatpush1.msra.mxu0 %v253
    %263 = vmatprep.subr.mxu0 0.0
    %264 = vmatpush1.msra.mxu0 %v254
    %265 = vmatprep.subr.mxu0 0.0
    %266 = vmatpush1.msra.mxu0 %v255
    %267 = vmatprep.subr.mxu0 0.0
    %268 = vmatpush1.msra.mxu0 %v256
    %269 = vmatprep.subr.mxu0 0.0
    %270 = vmatpush1.msra.mxu0 0.0
    %271 = vmatprep.subr.mxu0 0.0
    %272 = vmatpush1.msra.mxu0 0.0
    %273 = vmatprep.subr.mxu0 0.0
    %274 = vmatpush1.msra.mxu0 0.0
    %275 = vmatprep.subr.mxu0 0.0
    %276 = vmatpush1.msra.mxu0 0.0
    %277 = vmatprep.subr.mxu0 0.0
    %278 = vmatpush1.msra.mxu0 0.0
    %279 = vmatprep.subr.mxu0 0.0
    %280 = vmatpush1.msra.mxu0 0.0
    %281 = vmatprep.subr.mxu0 0.0
    %282 = vmatpush1.msra.mxu0 0.0
    %283 = vmatprep.subr.mxu0 0.0
    %284 = vmatpush1.msra.mxu0 0.0
    %285 = vmatprep.subr.mxu0 0.0
    %286 = vmatpush1.msra.mxu0 0.0
    %287 = vmatprep.subr.mxu0 0.0
    %288 = vmatpush1.msra.mxu0 0.0
    %289 = vmatprep.subr.mxu0 0.0
    %290 = vmatpush1.msra.mxu0 0.0
    %291 = vmatprep.subr.mxu0 0.0
    %292 = vmatpush1.msra.mxu0 0.0
    %293 = vmatprep.subr.mxu0 0.0
    %294 = vmatpush1.msra.mxu0 0.0
    %295 = vmatprep.subr.mxu0 0.0
    %296 = vmatpush1.msra.mxu0 0.0
    %297 = vmatprep.subr.mxu0 0.0
    %298 = vmatpush1.msra.mxu0 0.0
    %299 = vmatprep.subr.mxu0 0.0
    %300 = vmatpush1.msra.mxu0 0.0
    %301 = vmatprep.subr.mxu0 0.0
    %302 = vmatpush1.msra.mxu0 0.0
    %303 = vmatprep.subr.mxu0 0.0
    %304 = vmatpush1.msra.mxu0 0.0
    %305 = vmatprep.subr.mxu0 0.0
    %306 = vmatpush1.msra.mxu0 0.0
    %307 = vmatprep.subr.mxu0 0.0
    %308 = vmatpush1.msra.mxu0 0.0
    %309 = vmatprep.subr.mxu0 0.0
    %310 = vmatpush1.msra.mxu0 0.0
    %311 = vmatprep.subr.mxu0 0.0
    %312 = vmatpush1.msra.mxu0 0.0
    %313 = vmatprep.subr.mxu0 0.0
    %314 = vmatpush1.msra.mxu0 0.0
    %315 = vmatprep.subr.mxu0 0.0
    %316 = vmatpush1.msra.mxu0 0.0
    %317 = vmatprep.subr.mxu0 0.0
    %318 = vmatpush1.msra.mxu0 0.0
    %319 = vmatprep.subr.mxu0 0.0
    %320 = vmatpush1.msra.mxu0 0.0
    %321 = vmatprep.subr.mxu0 0.0
    %322 = vmatpush1.msra.mxu0 0.0
    %323 = vmatprep.subr.mxu0 0.0
    %324 = vmatpush1.msra.mxu0 0.0
    %325 = vmatprep.mubr.f32.mxu0 0.0
    %326 = vmatmul.mubr.f32.gmra.mrb[0].mxu0 %v259
    %v327 = vpop.f32.mrb[0].mxu0
    %v328 = vadd.f32 0.0, %v327
    %v329 = vpop.f32.mrb[0].mxu0
    %330 = vdwg.mxu0
    %332 = vrot.lane.b32.xlu0 %v170, 16
    %v333 = vpop.permute.xlu0 %332
    %336 = vrot.lane.b32.xlu0 %v249, 32
    %v337 = vpop.permute.xlu0 %336
    %340 = vrot.lane.b32.xlu0 %v328, 48
    %v341 = vpop.permute.xlu0 %340
    %vm343 = vcmask 130048
    %v344 = vsel %vm343, %v91, %v333
    %v345 = vsel %vm20, %v344, %v337
    %vm346 = vcmask 392192
    %v347 = vsel %vm346, %v345, %v341
    %v348 = vld [vmem:[%s2] sm:$0x1]
    %v350 = vlaneseq
    %v351 = vshrl.u32 %v350, 7
    %v352 = vsub.s32 0, %v351
    %v353 = vrot.slane %v348, %v352
    %v355 = vadd.f32 %v347, %v353
    %vm356 = vcmask 523264
    %357 = vst.msk [vmem:[#allocation2] sm:$0xff] %vm356, %v355
    // Predicated region
    $region14: #{tpu_custom_call.1} parent=1 // pred_check
      _
    $region15: #{tpu_custom_call.1} parent=1 // pred_check_branch
      %359 = sbr.rel (0) target = $region17
    $region16: #{tpu_custom_call.1} parent=1 // pred_region
      %s361 = ssub.s32 128, 128
      %362 = vsyncadd [#allocation3], %s361
      %s364 = sshll.u32 [#allocation2], 4
      %s365 = int_to_ptr.vmem [resolvable:$true] %s364
      %367 = dma.vmem_to_hbm [thread:$0]  %s365, 128, %s3, [#allocation3]
    $region17: #{tpu_custom_call.1} parent=1 // pred_fallthru
      _
    // Predicated region
    $region18: #{tpu_custom_call.1} parent=1 // pred_check
      _
    $region19: #{tpu_custom_call.1} parent=1 // pred_check_branch
      %369 = sbr.rel (0) target = $region21
    $region20: #{tpu_custom_call.1} parent=1 // pred_region
      %370 = dma.done [#allocation3], 128
    $region21: #{tpu_custom_call.1} parent=1 // pred_fallthru
      _
    %371 = vsyncpa [#allocation3], 1

</llo_original>
